<compile_context>
chip_gen: v6e
topology: v6e:2x2x1
jax: 0.10.0
libtpu: 0.0.40
codegen_flags: <defaults>
</compile_context>

<pallas_src>
import functools

import jax
import jax.numpy as jnp
import numpy as np
from jax import lax
from jax.experimental import pallas as pl
from jax.experimental.pallas import tpu as pltpu


def _round_up(x, m):
    return ((x + m - 1) // m) * m


def _softtriple_kernel(x_ref, lbl_ref, w_ref, p_ref, out_ref, *,
                       la, gamma_inv, tau, margin, K, C, Cp, n_true):
    step = pl.program_id(0)
    last = pl.num_programs(0) - 1

    @pl.when(step == 0)
    def _init():
        out_ref[...] = jnp.zeros_like(out_ref)

    # ---- L2-normalize the embedding tile (rsqrt -> EUP, no divide) ----
    X = x_ref[...]                                                    # (tn, D) f32
    inv_n = lax.rsqrt(jnp.maximum(jnp.sum(X * X, axis=-1, keepdims=True), 1e-24))
    Xn = (X * inv_n).astype(jnp.bfloat16)

    # proxies arrive already L2-normalized: (D, K*Cp) f32, k-major class blocks.
    P = p_ref[...]
    Pb = P.astype(jnp.bfloat16)

    # ---- single fused MXU matmul: (tn, D) x (D, K*Cp) -> (tn, K*Cp) ----
    sims = jnp.dot(Xn, Pb, preferred_element_type=jnp.float32)

    # ---- online softmax over the K sub-centers (per class) ----
    s = sims[:, 0:Cp]
    m = s * gamma_inv
    denom = jnp.ones_like(s)
    num = s
    for k in range(1, K):
        sk = sims[:, k * Cp:(k + 1) * Cp]
        sck = sk * gamma_inv
        m_new = jnp.maximum(m, sck)
        a = jnp.exp(m - m_new)
        b = jnp.exp(sck - m_new)
        denom = a * denom + b
        num = a * num + b * sk
        m = m_new
    simClass = num * pl.reciprocal(denom, approx=True)                # (tn, Cp)

    # ---- margin + weighted cross entropy over the (padded) class axis ----
    tn = simClass.shape[0]
    cls = lax.broadcasted_iota(jnp.int32, (tn, Cp), 1)
    onehot = (cls == lbl_ref[...]).astype(jnp.float32)
    pad_neg = jnp.where(cls < C, 0.0, -1e9).astype(jnp.float32)
    logits = la * (simClass - margin * onehot) + pad_neg
    lmax = jnp.max(logits, axis=-1, keepdims=True)
    lse = jnp.log(jnp.sum(jnp.exp(logits - lmax), axis=-1, keepdims=True)) + lmax
    ce = jnp.sum(onehot * (lse - logits), axis=-1, keepdims=True)     # (tn, 1)
    out_ref[...] += jnp.sum(w_ref[...] * ce, axis=(0, 1), keepdims=True)

    # ---- finalize: mean over true N + proxy regularizer, exactly once ----
    @pl.when(step == last)
    def _finalize():
        total = out_ref[...] * (1.0 / n_true)
        if tau > 0.0 and K > 1:
            lane = lax.broadcasted_iota(jnp.int32, (1, Cp), 1)
            vmask = (lane < C).astype(jnp.float32)
            reg_vec = jnp.zeros((1, Cp), jnp.float32)
            for k1 in range(K):
                P1 = P[:, k1 * Cp:(k1 + 1) * Cp]
                for k2 in range(k1 + 1, K):
                    P2 = P[:, k2 * Cp:(k2 + 1) * Cp]
                    d = jnp.sum(P1 * P2, axis=0, keepdims=True)       # (1, Cp)
                    reg_vec = reg_vec + vmask * jnp.sqrt(
                        jnp.maximum(2.0 + 1e-5 - 2.0 * d, 0.0))
            reg = jnp.sum(reg_vec) / (C * K * (K - 1.0))
            total = total + tau * reg
        out_ref[...] = total


def _pick_tile_n(N, D, K, Cp, budget_bytes=40 * 1024 * 1024):
    """Largest batch tile whose working set fits a conservative VMEM budget
    (sized for v7x's 64 MiB physical VMEM with headroom)."""
    def est(t):
        return (2 * t * (D + 2) * 4          # X + labels + weights, double-buffered
                + 2 * D * K * Cp * 4         # f32 proxies (resident)
                + D * K * Cp * 2             # bf16 proxy copy
                + t * K * Cp * 4             # fused similarity tile
                + 8 * t * Cp * 4)            # softmax / CE intermediates
    tile = min(256, _round_up(N, 8))
    tile = _round_up(tile, 8)
    while tile > 8 and est(tile) > budget_bytes:
        tile = _round_up(tile // 2, 8)
    return tile


def soft_triple_reweight(X, proxies, labels, weights, *,
                         la, gamma, tau, margin, K, nb_classes):
    """Pallas implementation of SoftTriple_reweight.forward (returns scalar loss)."""
    N, D = X.shape
    C = int(nb_classes)
    K = int(K)
    assert proxies.shape == (C * K, D)

    Cp = _round_up(C, 128)                       # lane-dense class axis
    tile_n = _pick_tile_n(N, D, K, Cp)
    Np = _round_up(N, tile_n)

    # --- glue: hoist proxy normalization + layout out of the per-tile path ---
    Pn = proxies.astype(jnp.float32)
    Pn = Pn / jnp.maximum(jnp.linalg.norm(Pn, axis=-1, keepdims=True), 1e-12)
    # (C*K, D) -> (C, K, D) -> (K, D, C) -> pad classes -> (D, K*Cp), k-major
    P3 = jnp.transpose(Pn.reshape(C, K, D), (1, 2, 0))
    P3 = jnp.pad(P3, ((0, 0), (0, 0), (0, Cp - C)))
    P_all = jnp.transpose(P3, (1, 0, 2)).reshape(D, K * Cp)

    # pad the batch: zero-weight rows contribute nothing; mean uses true N.
    Xp = jnp.pad(X.astype(jnp.float32), ((0, Np - N), (0, 0)))
    lbl = jnp.pad(labels.astype(jnp.int32), (0, Np - N)).reshape(Np, 1)
    w = jnp.pad(weights.astype(jnp.float32), (0, Np - N)).reshape(Np, 1)

    kernel = functools.partial(
        _softtriple_kernel,
        la=float(la), gamma_inv=1.0 / float(gamma), tau=float(tau),
        margin=float(margin), K=K, C=C, Cp=int(Cp), n_true=float(N))

    # TODO(synk): on v7x megacore this could emit per-tile partial sums on a
    # "parallel" grid axis (reduced in JAX) to use both TensorCores; the single
    # resident accumulator with an "arbitrary" reduction axis is kept here.
    out = pl.pallas_call(
        kernel,
        out_shape=jax.ShapeDtypeStruct((1, 1), jnp.float32),
        grid=(Np // tile_n,),
        in_specs=[
            pl.BlockSpec((tile_n, D), lambda i: (i, 0)),        # X tile
            pl.BlockSpec((tile_n, 1), lambda i: (i, 0)),        # labels
            pl.BlockSpec((tile_n, 1), lambda i: (i, 0)),        # weights
            pl.BlockSpec((D, K * Cp), lambda i: (0, 0)),        # proxies (resident)
        ],
        out_specs=pl.BlockSpec((1, 1), lambda i: (0, 0)),       # loss accumulator
        compiler_params=pltpu.CompilerParams(
            dimension_semantics=("arbitrary",),
            vmem_limit_bytes=48 * 1024 * 1024),
    )(Xp, lbl, w, P_all)
    return out[0, 0]


def _reference(X, proxies, labels, weights, *, la, gamma, tau, margin, K, nb_classes):
    """Pure-JAX reference mirroring the PyTorch forward."""
    hp = jax.lax.Precision.HIGHEST
    P = proxies / jnp.linalg.norm(proxies, axis=-1, keepdims=True)
    Xn = X / jnp.linalg.norm(X, axis=-1, keepdims=True)
    simInd = jnp.matmul(Xn, P.T, precision=hp)
    simStruc = simInd.reshape(-1, nb_classes, K)
    prob = jax.nn.softmax(simStruc * (1.0 / gamma), axis=2)
    simClass = jnp.sum(prob * simStruc, axis=2)
    oh = jax.nn.one_hot(labels, nb_classes, dtype=jnp.float32)
    marginM = oh * margin
    # NOTE: original code binarizes over len(P)=nb_classes*K classes, which only
    # broadcasts when K==1; we use the (original SoftTriple) nb_classes one-hot.
    loss = weights * jnp.sum(-oh * jax.nn.log_softmax(la * (simClass - marginM), axis=-1),
                             axis=-1)
    out = loss.mean()
    if tau > 0 and K > 1:
        simCenter = jnp.matmul(P, P.T, precision=hp)
        mask = np.zeros((nb_classes * K, nb_classes * K), dtype=np.float32)
        for i in range(nb_classes):
            for j in range(K):
                mask[i * K + j, i * K + j + 1:(i + 1) * K] = 1.0
        reg = jnp.sum(jnp.sqrt(2.0 + 1e-5 - 2.0 * simCenter) * mask) / (
            nb_classes * K * (K - 1.0))
        out = out + tau * reg
    return out


if __name__ == "__main__":
    # hyper-parameters (SoftTriple defaults, small synthetic shapes)
    la, gamma, tau, margin = 20.0, 0.1, 0.2, 0.01
    K, nb_classes, sz_embed = 3, 4, 32
    N = 8

    key = jax.random.PRNGKey(0)
    k_x, k_p, k_t, k_w = jax.random.split(key, 4)

    X = jax.random.normal(k_x, (N, sz_embed), dtype=jnp.float32)
    # kaiming_normal_(mode='fan_out') on a (C*K, D) tensor: std = sqrt(2 / fan_out)
    std = float(np.sqrt(2.0 / (nb_classes * K)))
    proxies = std * jax.random.normal(k_p, (nb_classes * K, sz_embed), dtype=jnp.float32)
    T = jax.random.randint(k_t, (N,), 0, nb_classes, dtype=jnp.int32)
    weights = jax.random.uniform(k_w, (N,), dtype=jnp.float32, minval=0.5, maxval=1.5)

    # TODO(synk): the PyTorch code calls binarize_and_smooth_labels with
    # nb_classes=len(P)=nb_classes*K, which only type-checks for K==1; we use the
    # nb_classes one-hot (original SoftTriple semantics), exact when K==1.
    loss = soft_triple_reweight(X, proxies, T, weights,
                                la=la, gamma=gamma, tau=tau, margin=margin,
                                K=K, nb_classes=nb_classes)
    loss = jax.block_until_ready(loss)

    ref = _reference(X, proxies, T, weights,
                     la=la, gamma=gamma, tau=tau, margin=margin,
                     K=K, nb_classes=nb_classes)
    np.testing.assert_allclose(np.asarray(loss), np.asarray(ref), rtol=5e-2, atol=5e-2)

    print("KERNEL_OK")
</pallas_src>

<mosaic_0001>
module attributes {stable_mosaic.version = 11 : i64} {
  func.func @_softtriple_kernel(%arg0: i32, %arg1: memref<8x32xf32, #tpu.memory_space<vmem>>, %arg2: memref<8x1xi32, #tpu.memory_space<vmem>>, %arg3: memref<8x1xf32, #tpu.memory_space<vmem>>, %arg4: memref<32x384xf32, #tpu.memory_space<vmem>>, %arg5: memref<1x1xf32, #tpu.memory_space<vmem>>) attributes {dimension_semantics = [#tpu.dimension_semantics<arbitrary>], iteration_bounds = array<i64: 1>, scalar_prefetch = 0 : i64, scratch_operands = 0 : i64, tpu.core_type = #tpu.core_type<tc>, window_params = [{transform_indices = @transform_0, window_bounds = array<i64: 8, 32>}, {transform_indices = @transform_1, window_bounds = array<i64: 8, 1>}, {transform_indices = @transform_2, window_bounds = array<i64: 8, 1>}, {pipeline_mode = #tpu.pipeline_mode<synchronous>, transform_indices = @transform_3, window_bounds = array<i64: 32, 384>}, {pipeline_mode = #tpu.pipeline_mode<synchronous>, transform_indices = @transform_4, window_bounds = array<i64: 1, 1>}]} {
    %c0_i32 = arith.constant 0 : i32
    %0 = arith.cmpi eq, %arg0, %c0_i32 : i32
    %1 = arith.extui %0 : i1 to i32
    %c0_i32_0 = arith.constant 0 : i32
    %2 = arith.cmpi ne, %1, %c0_i32_0 : i32
    scf.if %2 {
      %cst_28 = arith.constant 0.000000e+00 : f32
      %92 = vector.broadcast %cst_28 : f32 to vector<1x1xf32>
      %c0_29 = arith.constant 0 : index
      %c0_30 = arith.constant 0 : index
      %93 = vector.load %arg5[%c0_29, %c0_30] : memref<1x1xf32, #tpu.memory_space<vmem>>, vector<1x1xf32>
      tpu.vector_store %arg5[%c0_29, %c0_30], %92 {strides = array<i32>} : memref<1x1xf32, #tpu.memory_space<vmem>>, vector<1x1xf32>,
    } else {
    }
    %c0 = arith.constant 0 : index
    %c0_1 = arith.constant 0 : index
    %3 = vector.load %arg1[%c0, %c0_1] : memref<8x32xf32, #tpu.memory_space<vmem>>, vector<8x32xf32>
    %4 = arith.mulf %3, %3 : vector<8x32xf32>
    %cst = arith.constant dense<0.000000e+00> : vector<8xf32>
    %5 = vector.multi_reduction <add>, %4, %cst [1] : vector<8x32xf32> to vector<8xf32>
    %6 = vector.shape_cast %5 : vector<8xf32> to vector<8x1xf32>
    %cst_2 = arith.constant 1.000000e-24 : f32
    %7 = vector.broadcast %cst_2 : f32 to vector<8x1xf32>
    %8 = arith.maximumf %6, %7 : vector<8x1xf32>
    %9 = math.rsqrt %8 : vector<8x1xf32>
    %10 = vector.broadcast %9 : vector<8x1xf32> to vector<8x32xf32>
    %11 = arith.mulf %3, %10 : vector<8x32xf32>
    %12 = arith.truncf %11 : vector<8x32xf32> to vector<8x32xbf16>
    %c0_3 = arith.constant 0 : index
    %c0_4 = arith.constant 0 : index
    %13 = vector.load %arg4[%c0_3, %c0_4] : memref<32x384xf32, #tpu.memory_space<vmem>>, vector<32x384xf32>
    %14 = arith.truncf %13 : vector<32x384xf32> to vector<32x384xbf16>
    %cst_5 = arith.constant dense<0.000000e+00> : vector<8x384xf32>
    %15 = tpu.matmul %12, %14, %cst_5 {dimension_numbers = #tpu.dot_dimension_numbers<[1], [0], [0], [1], [0, 0, 1, 1], [], []>} : vector<8x32xbf16>, vector<32x384xbf16>, vector<8x384xf32> -> vector<8x384xf32>
    %16 = vector.extract_strided_slice %15 {offsets = [0, 0], sizes = [8, 128], strides = [1, 1]} : vector<8x384xf32> to vector<8x128xf32>
    %cst_6 = arith.constant 1.000000e+01 : f32
    %17 = vector.broadcast %cst_6 : f32 to vector<8x128xf32>
    %18 = arith.mulf %16, %17 : vector<8x128xf32>
    %cst_7 = arith.constant 1.000000e+00 : f32
    %19 = vector.broadcast %cst_7 : f32 to vector<8x128xf32>
    %20 = vector.extract_strided_slice %15 {offsets = [0, 128], sizes = [8, 128], strides = [1, 1]} : vector<8x384xf32> to vector<8x128xf32>
    %cst_8 = arith.constant 1.000000e+01 : f32
    %21 = vector.broadcast %cst_8 : f32 to vector<8x128xf32>
    %22 = arith.mulf %20, %21 : vector<8x128xf32>
    %23 = arith.maximumf %18, %22 : vector<8x128xf32>
    %24 = arith.subf %18, %23 : vector<8x128xf32>
    %25 = math.exp %24 : vector<8x128xf32>
    %26 = arith.subf %22, %23 : vector<8x128xf32>
    %27 = math.exp %26 : vector<8x128xf32>
    %28 = arith.mulf %25, %19 : vector<8x128xf32>
    %29 = arith.addf %28, %27 : vector<8x128xf32>
    %30 = arith.mulf %25, %16 : vector<8x128xf32>
    %31 = arith.mulf %27, %20 : vector<8x128xf32>
    %32 = arith.addf %30, %31 : vector<8x128xf32>
    %33 = vector.extract_strided_slice %15 {offsets = [0, 256], sizes = [8, 128], strides = [1, 1]} : vector<8x384xf32> to vector<8x128xf32>
    %cst_9 = arith.constant 1.000000e+01 : f32
    %34 = vector.broadcast %cst_9 : f32 to vector<8x128xf32>
    %35 = arith.mulf %33, %34 : vector<8x128xf32>
    %36 = arith.maximumf %23, %35 : vector<8x128xf32>
    %37 = arith.subf %23, %36 : vector<8x128xf32>
    %38 = math.exp %37 : vector<8x128xf32>
    %39 = arith.subf %35, %36 : vector<8x128xf32>
    %40 = math.exp %39 : vector<8x128xf32>
    %41 = arith.mulf %38, %29 : vector<8x128xf32>
    %42 = arith.addf %41, %40 : vector<8x128xf32>
    %43 = arith.mulf %38, %32 : vector<8x128xf32>
    %44 = arith.mulf %40, %33 : vector<8x128xf32>
    %45 = arith.addf %43, %44 : vector<8x128xf32>
    %46 = tpu.reciprocal %42 {approx = true} : vector<8x128xf32> -> vector<8x128xf32>
    %47 = arith.mulf %45, %46 : vector<8x128xf32>
    %48 = tpu.iota {dimensions = array<i32: 1>} : vector<8x128xi32>
    %c0_10 = arith.constant 0 : index
    %c0_11 = arith.constant 0 : index
    %49 = vector.load %arg2[%c0_10, %c0_11] : memref<8x1xi32, #tpu.memory_space<vmem>>, vector<8x1xi32>
    %50 = vector.broadcast %49 : vector<8x1xi32> to vector<8x128xi32>
    %51 = arith.cmpi eq, %48, %50 : vector<8x128xi32>
    %52 = arith.extui %51 : vector<8x128xi1> to vector<8x128xi32>
    %53 = arith.sitofp %52 : vector<8x128xi32> to vector<8x128xf32>
    %c4_i32 = arith.constant 4 : i32
    %54 = vector.broadcast %c4_i32 : i32 to vector<8x128xi32>
    %55 = arith.cmpi slt, %48, %54 : vector<8x128xi32>
    %cst_12 = arith.constant 0.000000e+00 : f32
    %cst_13 = arith.constant -1.000000e+09 : f32
    %56 = vector.broadcast %cst_12 : f32 to vector<8x128xf32>
    %57 = vector.broadcast %cst_13 : f32 to vector<8x128xf32>
    %58 = arith.select %55, %56, %57 : vector<8x128xi1>, vector<8x128xf32>
    %cst_14 = arith.constant 0.00999999977 : f32
    %59 = vector.broadcast %cst_14 : f32 to vector<8x128xf32>
    %60 = arith.mulf %59, %53 : vector<8x128xf32>
    %61 = arith.subf %47, %60 : vector<8x128xf32>
    %cst_15 = arith.constant 2.000000e+01 : f32
    %62 = vector.broadcast %cst_15 : f32 to vector<8x128xf32>
    %63 = arith.mulf %62, %61 : vector<8x128xf32>
    %64 = arith.addf %63, %58 : vector<8x128xf32>
    %cst_16 = arith.constant dense<0xFF800000> : vector<8xf32>
    %65 = vector.multi_reduction <maximumf>, %64, %cst_16 [1] : vector<8x128xf32> to vector<8xf32>
    %66 = vector.shape_cast %65 : vector<8xf32> to vector<8x1xf32>
    %67 = vector.broadcast %66 : vector<8x1xf32> to vector<8x128xf32>
    %68 = arith.subf %64, %67 : vector<8x128xf32>
    %69 = math.exp %68 : vector<8x128xf32>
    %cst_17 = arith.constant dense<0.000000e+00> : vector<8xf32>
    %70 = vector.multi_reduction <add>, %69, %cst_17 [1] : vector<8x128xf32> to vector<8xf32>
    %71 = vector.shape_cast %70 : vector<8xf32> to vector<8x1xf32>
    %72 = math.log %71 : vector<8x1xf32>
    %73 = arith.addf %72, %66 : vector<8x1xf32>
    %74 = vector.broadcast %73 : vector<8x1xf32> to vector<8x128xf32>
    %75 = arith.subf %74, %64 : vector<8x128xf32>
    %76 = arith.mulf %53, %75 : vector<8x128xf32>
    %cst_18 = arith.constant dense<0.000000e+00> : vector<8xf32>
    %77 = vector.multi_reduction <add>, %76, %cst_18 [1] : vector<8x128xf32> to vector<8xf32>
    %78 = vector.shape_cast %77 : vector<8xf32> to vector<8x1xf32>
    %c0_19 = arith.constant 0 : index
    %c0_20 = arith.constant 0 : index
    %79 = vector.load %arg5[%c0_19, %c0_20] : memref<1x1xf32, #tpu.memory_space<vmem>>, vector<1x1xf32>
    %c0_21 = arith.constant 0 : index
    %c0_22 = arith.constant 0 : index
    %80 = vector.load %arg3[%c0_21, %c0_22] : memref<8x1xf32, #tpu.memory_space<vmem>>, vector<8x1xf32>
    %81 = arith.mulf %80, %78 : vector<8x1xf32>
    %82 = vector.shape_cast %81 : vector<8x1xf32> to vector<1x8x1xf32>
    %cst_23 = arith.constant dense<0.000000e+00> : vector<1xf32>
    %83 = vector.multi_reduction <add>, %82, %cst_23 [1, 2] : vector<1x8x1xf32> to vector<1xf32>
    %84 = vector.shape_cast %83 : vector<1xf32> to vector<1x1x1xf32>
    %85 = vector.extract %84[0, 0, 0] : f32 from vector<1x1x1xf32>
    %86 = vector.broadcast %85 : f32 to vector<1x1xf32>
    %87 = arith.addf %79, %86 : vector<1x1xf32>
    %c0_24 = arith.constant 0 : index
    %c0_25 = arith.constant 0 : index
    %88 = vector.load %arg5[%c0_24, %c0_25] : memref<1x1xf32, #tpu.memory_space<vmem>>, vector<1x1xf32>
    tpu.vector_store %arg5[%c0_24, %c0_25], %87 {strides = array<i32>} : memref<1x1xf32, #tpu.memory_space<vmem>>, vector<1x1xf32>,
    %c0_i32_26 = arith.constant 0 : i32
    %89 = arith.cmpi eq, %arg0, %c0_i32_26 : i32
    %90 = arith.extui %89 : i1 to i32
    %c0_i32_27 = arith.constant 0 : i32
    %91 = arith.cmpi ne, %90, %c0_i32_27 : i32
    scf.if %91 {
      %c0_28 = arith.constant 0 : index
      %c0_29 = arith.constant 0 : index
      %92 = vector.load %arg5[%c0_28, %c0_29] : memref<1x1xf32, #tpu.memory_space<vmem>>, vector<1x1xf32>
      %cst_30 = arith.constant 1.250000e-01 : f32
      %93 = vector.broadcast %cst_30 : f32 to vector<1x1xf32>
      %94 = arith.mulf %92, %93 : vector<1x1xf32>
      %95 = tpu.iota {dimensions = array<i32: 1>} : vector<1x128xi32>
      %c4_i32_31 = arith.constant 4 : i32
      %96 = vector.broadcast %c4_i32_31 : i32 to vector<1x128xi32>
      %97 = arith.cmpi slt, %95, %96 : vector<1x128xi32>
      %98 = arith.extui %97 : vector<1x128xi1> to vector<1x128xi32>
      %99 = arith.sitofp %98 : vector<1x128xi32> to vector<1x128xf32>
      %cst_32 = arith.constant 0.000000e+00 : f32
      %100 = vector.broadcast %cst_32 : f32 to vector<1x128xf32>
      %101 = vector.extract_strided_slice %13 {offsets = [0, 0], sizes = [32, 128], strides = [1, 1]} : vector<32x384xf32> to vector<32x128xf32>
      %102 = vector.extract_strided_slice %13 {offsets = [0, 128], sizes = [32, 128], strides = [1, 1]} : vector<32x384xf32> to vector<32x128xf32>
      %103 = arith.mulf %101, %102 : vector<32x128xf32>
      %cst_33 = arith.constant dense<0.000000e+00> : vector<128xf32>
      %104 = vector.multi_reduction <add>, %103, %cst_33 [0] : vector<32x128xf32> to vector<128xf32>
      %105 = vector.shape_cast %104 : vector<128xf32> to vector<1x128xf32>
      %cst_34 = arith.constant 2.000000e+00 : f32
      %106 = vector.broadcast %cst_34 : f32 to vector<1x128xf32>
      %107 = arith.mulf %106, %105 : vector<1x128xf32>
      %cst_35 = arith.constant 2.000010e+00 : f32
      %108 = vector.broadcast %cst_35 : f32 to vector<1x128xf32>
      %109 = arith.subf %108, %107 : vector<1x128xf32>
      %cst_36 = arith.constant 0.000000e+00 : f32
      %110 = vector.broadcast %cst_36 : f32 to vector<1x128xf32>
      %111 = arith.maximumf %109, %110 : vector<1x128xf32>
      %112 = math.sqrt %111 : vector<1x128xf32>
      %113 = arith.mulf %99, %112 : vector<1x128xf32>
      %114 = arith.addf %100, %113 : vector<1x128xf32>
      %115 = vector.extract_strided_slice %13 {offsets = [0, 256], sizes = [32, 128], strides = [1, 1]} : vector<32x384xf32> to vector<32x128xf32>
      %116 = arith.mulf %101, %115 : vector<32x128xf32>
      %cst_37 = arith.constant dense<0.000000e+00> : vector<128xf32>
      %117 = vector.multi_reduction <add>, %116, %cst_37 [0] : vector<32x128xf32> to vector<128xf32>
      %118 = vector.shape_cast %117 : vector<128xf32> to vector<1x128xf32>
      %cst_38 = arith.constant 2.000000e+00 : f32
      %119 = vector.broadcast %cst_38 : f32 to vector<1x128xf32>
      %120 = arith.mulf %119, %118 : vector<1x128xf32>
      %cst_39 = arith.constant 2.000010e+00 : f32
      %121 = vector.broadcast %cst_39 : f32 to vector<1x128xf32>
      %122 = arith.subf %121, %120 : vector<1x128xf32>
      %cst_40 = arith.constant 0.000000e+00 : f32
      %123 = vector.broadcast %cst_40 : f32 to vector<1x128xf32>
      %124 = arith.maximumf %122, %123 : vector<1x128xf32>
      %125 = math.sqrt %124 : vector<1x128xf32>
      %126 = arith.mulf %99, %125 : vector<1x128xf32>
      %127 = arith.addf %114, %126 : vector<1x128xf32>
      %128 = vector.extract_strided_slice %13 {offsets = [0, 128], sizes = [32, 128], strides = [1, 1]} : vector<32x384xf32> to vector<32x128xf32>
      %129 = vector.extract_strided_slice %13 {offsets = [0, 256], sizes = [32, 128], strides = [1, 1]} : vector<32x384xf32> to vector<32x128xf32>
      %130 = arith.mulf %128, %129 : vector<32x128xf32>
      %cst_41 = arith.constant dense<0.000000e+00> : vector<128xf32>
      %131 = vector.multi_reduction <add>, %130, %cst_41 [0] : vector<32x128xf32> to vector<128xf32>
      %132 = vector.shape_cast %131 : vector<128xf32> to vector<1x128xf32>
      %cst_42 = arith.constant 2.000000e+00 : f32
      %133 = vector.broadcast %cst_42 : f32 to vector<1x128xf32>
      %134 = arith.mulf %133, %132 : vector<1x128xf32>
      %cst_43 = arith.constant 2.000010e+00 : f32
      %135 = vector.broadcast %cst_43 : f32 to vector<1x128xf32>
      %136 = arith.subf %135, %134 : vector<1x128xf32>
      %cst_44 = arith.constant 0.000000e+00 : f32
      %137 = vector.broadcast %cst_44 : f32 to vector<1x128xf32>
      %138 = arith.maximumf %136, %137 : vector<1x128xf32>
      %139 = math.sqrt %138 : vector<1x128xf32>
      %140 = arith.mulf %99, %139 : vector<1x128xf32>
      %141 = arith.addf %127, %140 : vector<1x128xf32>
      %142 = vector.shape_cast %141 : vector<1x128xf32> to vector<1x1x128xf32>
      %cst_45 = arith.constant dense<0.000000e+00> : vector<1xf32>
      %143 = vector.multi_reduction <add>, %142, %cst_45 [1, 2] : vector<1x1x128xf32> to vector<1xf32>
      %144 = vector.shape_cast %143 : vector<1xf32> to vector<1x1x1xf32>
      %145 = vector.extract %144[0, 0, 0] : f32 from vector<1x1x1xf32>
      %cst_46 = arith.constant 2.400000e+01 : f32
      %146 = arith.divf %145, %cst_46 : f32
      %cst_47 = arith.constant 2.000000e-01 : f32
      %147 = arith.mulf %cst_47, %146 : f32
      %148 = vector.broadcast %147 : f32 to vector<1x1xf32>
      %149 = arith.addf %94, %148 : vector<1x1xf32>
      %c0_48 = arith.constant 0 : index
      %c0_49 = arith.constant 0 : index
      %150 = vector.load %arg5[%c0_48, %c0_49] : memref<1x1xf32, #tpu.memory_space<vmem>>, vector<1x1xf32>
      tpu.vector_store %arg5[%c0_48, %c0_49], %149 {strides = array<i32>} : memref<1x1xf32, #tpu.memory_space<vmem>>, vector<1x1xf32>,
    } else {
    }
    return
  }
  func.func @transform_0(%arg0: i32) -> (i32, i32) {
    %c0_i32 = arith.constant 0 : i32
    %c0_i32_0 = arith.constant 0 : i32
    return %arg0, %c0_i32 : i32, i32
  }
  func.func @transform_1(%arg0: i32) -> (i32, i32) {
    %c0_i32 = arith.constant 0 : i32
    %c0_i32_0 = arith.constant 0 : i32
    return %arg0, %c0_i32 : i32, i32
  }
  func.func @transform_2(%arg0: i32) -> (i32, i32) {
    %c0_i32 = arith.constant 0 : i32
    %c0_i32_0 = arith.constant 0 : i32
    return %arg0, %c0_i32 : i32, i32
  }
  func.func @transform_3(%arg0: i32) -> (i32, i32) {
    %c0_i32 = arith.constant 0 : i32
    %c0_i32_0 = arith.constant 0 : i32
    %c0_i32_1 = arith.constant 0 : i32
    return %c0_i32, %c0_i32_0 : i32, i32
  }
  func.func @transform_4(%arg0: i32) -> (i32, i32) {
    %c0_i32 = arith.constant 0 : i32
    %c0_i32_0 = arith.constant 0 : i32
    %c0_i32_1 = arith.constant 0 : i32
    return %c0_i32, %c0_i32_0 : i32, i32
  }
}

</mosaic_0001>

<llo_original>
// kernel: tpu_custom_call.1
$region0: #{tpu_custom_call.1}
  #allocation0 [shape = 'u32[]', space=smem, size = 0x4, offset = 0x4, fixed_abs, tag = 'smem constant byte address 0x4 - core index']
  #allocation1 [shape = 'u32[144,128]{1,0:T(1,128)}', space=vmem, size = 0x12000, scoped, tag = 'internal scratch']
  %s0 = inlined_call_operand.vmem [shape: f32[8,32], index: 0, kind: input, shape index: {}]
  %s1 = inlined_call_operand.vmem [shape: s32[8,1], index: 1, kind: input, shape index: {}]
  %s2 = inlined_call_operand.vmem [shape: f32[8,1], index: 2, kind: input, shape index: {}]
  %s3 = inlined_call_operand.hbm [shape: f32[32,384], index: 3, kind: input, shape index: {}]
  %s4 = inlined_call_operand.hbm [shape: f32[1,1], index: 4, kind: output, shape index: {}]
  %s5 = sld [smem:[#allocation0]]
  $region38: #{tpu_custom_call.1} parent=0
    _
  %s7 = ssub.s32 1, %s5
  %s8 = scalar_select 0, %s7, %s5
  $region1: #{tpu_custom_call.1} parent=0
    #allocation2 [shape = 'u8[49152]{0}', space=vmem, size = 0xc000, scoped, tag = 'input window, operand 3, single buffered']
    #allocation3 [shape = 's32[1]{0}', space=sflag, size = 0x4, scoped, tag = 'scoped memory for tpu_custom_call.1']
    #allocation4 [shape = 's32[1]{0}', space=sflag, size = 0x4, scoped, tag = 'scoped memory for tpu_custom_call.1']
    #allocation5 [shape = 'u8[512]{0}', space=vmem, size = 0x400, scoped, tag = 'output window, operand 0, single buffered']
    %9 = vsyncpa [#allocation3], 0
    %10 = vsyncpa [#allocation4], 0
    // Predicated region
    $region2: #{tpu_custom_call.1} parent=1 // pred_check
      _
    $region3: #{tpu_custom_call.1} parent=1 // pred_check_branch
      %12 = sbr.rel (0) target = $region5
    $region4: #{tpu_custom_call.1} parent=1 // pred_region
      _
    $region5: #{tpu_custom_call.1} parent=1 // pred_fallthru
      _
    // Predicated region
    $region6: #{tpu_custom_call.1} parent=1 // pred_check
      _
    $region7: #{tpu_custom_call.1} parent=1 // pred_check_branch
      %14 = sbr.rel (0) target = $region9
    $region8: #{tpu_custom_call.1} parent=1 // pred_region
      _
    $region9: #{tpu_custom_call.1} parent=1 // pred_fallthru
      _
    // Predicated region
    $region10: #{tpu_custom_call.1} parent=1 // pred_check
      _
    $region11: #{tpu_custom_call.1} parent=1 // pred_check_branch
      %16 = sbr.rel (0) target = $region13
    $region12: #{tpu_custom_call.1} parent=1 // pred_region
      _
    $region13: #{tpu_custom_call.1} parent=1 // pred_fallthru
      _
    // Predicated region
    $region14: #{tpu_custom_call.1} parent=1 // pred_check
      _
    $region15: #{tpu_custom_call.1} parent=1 // pred_check_branch
      %18 = sbr.rel (0) target = $region17
    $region16: #{tpu_custom_call.1} parent=1 // pred_region
      %s20 = ssub.s32 1536, 1536
      %21 = vsyncadd [#allocation3], %s20
      %s22 = sshll.u32 [#allocation2], 4
      %s23 = int_to_ptr.vmem [resolvable:$true] %s22
      %28 = dma.hbm_to_vmem [thread:$0]  %s3, 1536, %s23, [#allocation3], 384, 384, 24
    $region17: #{tpu_custom_call.1} parent=1 // pred_fallthru
      _
    // Predicated region
    $region18: #{tpu_custom_call.1} parent=1 // pred_check
      _
    $region19: #{tpu_custom_call.1} parent=1 // pred_check_branch
      %30 = sbr.rel (0) target = $region21
    $region20: #{tpu_custom_call.1} parent=1 // pred_region
      %31 = dma.done [#allocation3], 1536
    $region21: #{tpu_custom_call.1} parent=1 // pred_fallthru
      _
    %p33 = scmp.eq.s32.totalorder 0, 0
    // Predicated region
    $region22: #{tpu_custom_call.1} parent=1 // pred_check
      %p34 = pneg %p33
    $region23: #{tpu_custom_call.1} parent=1 // pred_check_branch
      %36 = sbr.rel (%p34) target = $region25
    $region24: #{tpu_custom_call.1} parent=1 // pred_region
      %vm37 = vcmask 0
      %38 = vst.msk [vmem:[#allocation5] sm:$0x1] %vm37, 0.0
    $region25: #{tpu_custom_call.1} parent=1 // pred_fallthru
      _
    %v39 = vld [vmem:[%s0] sm:$0xff]
    %v40 = vmul.f32 %v39, %v39
    %vm41 = vcmask 261120
    %v42 = vsel %vm41, %v40, 0.0
    %43 = vadd.xlane.f32.xlu0 %v42
    %v44 = vpop.xlane.xlu0 %43
    %v45 = vmax.f32 %v44, 1e-24
    %v46 = vrsqrt.pop %v45
    %v47 = vmul.f32 %v39, %v46
    %v48 = vpack.c.bf16 %v47, %v47
    %v49 = vld [vmem:[#allocation2] sm:$0xff]
    %v50 = vld [vmem:[#allocation2 + $0x8] sm:$0xff]
    %v51 = vld [vmem:[#allocation2 + $0x10] sm:$0xff]
    %v52 = vld [vmem:[#allocation2 + $0x18] sm:$0xff]
    %v53 = vld [vmem:[#allocation2 + $0x20] sm:$0xff]
    %v54 = vld [vmem:[#allocation2 + $0x28] sm:$0xff]
    %v55 = vld [vmem:[#allocation2 + $0x30] sm:$0xff]
    %v56 = vld [vmem:[#allocation2 + $0x38] sm:$0xff]
    %v57 = vld [vmem:[#allocation2 + $0x40] sm:$0xff]
    %v58 = vld [vmem:[#allocation2 + $0x48] sm:$0xff]
    %v59 = vld [vmem:[#allocation2 + $0x50] sm:$0xff]
    %v60 = vld [vmem:[#allocation2 + $0x58] sm:$0xff]
    %v61 = vpack.c.bf16 %v52, %v49
    %v62 = vpack.c.bf16 %v53, %v50
    %v63 = vpack.c.bf16 %v54, %v51
    %v64 = vpack.c.bf16 %v58, %v55
    %v65 = vpack.c.bf16 %v59, %v56
    %v66 = vpack.c.bf16 %v60, %v57
    %v68 = vsel %vm41, %v48, 0
    %70 = vmatprep.subr.bf16.mxu0 0
    %71 = vmatpush1.bf16.msra.mxu0 0
    %72 = vmatprep.subr.bf16.mxu0 0
    %73 = vmatpush1.bf16.msra.mxu0 0
    %74 = vmatprep.subr.bf16.mxu0 0
    %75 = vmatpush1.bf16.msra.mxu0 0
    %76 = vmatprep.subr.bf16.mxu0 0
    %77 = vmatpush1.bf16.msra.mxu0 0
    %78 = vmatprep.subr.bf16.mxu0 0
    %79 = vmatpush1.bf16.msra.mxu0 0
    %80 = vmatprep.subr.bf16.mxu0 0
    %81 = vmatpush1.bf16.msra.mxu0 0
    %82 = vmatprep.subr.bf16.mxu0 %v65
    %83 = vmatpush1.bf16.msra.mxu0 %v64
    %84 = vmatprep.subr.bf16.mxu0 %v62
    %85 = vmatpush1.bf16.msra.mxu0 %v61
    %86 = vmatprep.subr.bf16.mxu0 0
    %87 = vmatpush2.bf16.msra.mxu0 0
    %88 = vmatprep.subr.bf16.mxu0 0
    %89 = vmatpush2.bf16.msra.mxu0 0
    %90 = vmatprep.subr.bf16.mxu0 0
    %91 = vmatpush2.bf16.msra.mxu0 0
    %92 = vmatprep.subr.bf16.mxu0 0
    %93 = vmatpush2.bf16.msra.mxu0 0
    %94 = vmatprep.subr.bf16.mxu0 0
    %95 = vmatpush2.bf16.msra.mxu0 0
    %96 = vmatprep.subr.bf16.mxu0 0
    %97 = vmatpush2.bf16.msra.mxu0 0
    %98 = vmatprep.subr.bf16.mxu0 0
    %99 = vmatpush2.bf16.msra.mxu0 0
    %100 = vmatprep.subr.bf16.mxu0 0
    %101 = vmatpush2.bf16.msra.mxu0 0
    %102 = vmatprep.mubr.bf16.mxu0 0
    %103 = vmatmul.mubr.bf16.gmra.mxu0 %v68
    %v104 = vpop.f32.mrf.mxu0
    %v105 = vadd.f32 0.0, %v104
    %v106 = vpop.f32.mrf.mxu0
    %v107 = vadd.f32 0.0, %v106
    %v108 = vpop.f32.mrf.mxu0
    %v109 = vpop.f32.mrf.mxu0
    %110 = vdwg.mxu0
    %111 = vmatprep.subr.bf16.mxu0 0
    %112 = vmatpush1.bf16.msra.mxu0 0
    %113 = vmatprep.subr.bf16.mxu0 0
    %114 = vmatpush1.bf16.msra.mxu0 0
    %115 = vmatprep.subr.bf16.mxu0 0
    %116 = vmatpush1.bf16.msra.mxu0 0
    %117 = vmatprep.subr.bf16.mxu0 0
    %118 = vmatpush1.bf16.msra.mxu0 0
    %119 = vmatprep.subr.bf16.mxu0 0
    %120 = vmatpush1.bf16.msra.mxu0 0
    %121 = vmatprep.subr.bf16.mxu0 0
    %122 = vmatpush1.bf16.msra.mxu0 0
    %123 = vmatprep.subr.bf16.mxu0 0
    %124 = vmatpush1.bf16.msra.mxu0 %v66
    %125 = vmatprep.subr.bf16.mxu0 0
    %126 = vmatpush1.bf16.msra.mxu0 %v63
    %127 = vmatprep.subr.bf16.mxu0 0
    %128 = vmatpush2.bf16.msra.mxu0 0
    %129 = vmatprep.subr.bf16.mxu0 0
    %130 = vmatpush2.bf16.msra.mxu0 0
    %131 = vmatprep.subr.bf16.mxu0 0
    %132 = vmatpush2.bf16.msra.mxu0 0
    %133 = vmatprep.subr.bf16.mxu0 0
    %134 = vmatpush2.bf16.msra.mxu0 0
    %135 = vmatprep.subr.bf16.mxu0 0
    %136 = vmatpush2.bf16.msra.mxu0 0
    %137 = vmatprep.subr.bf16.mxu0 0
    %138 = vmatpush2.bf16.msra.mxu0 0
    %139 = vmatprep.subr.bf16.mxu0 0
    %140 = vmatpush2.bf16.msra.mxu0 0
    %141 = vmatprep.subr.bf16.mxu0 0
    %142 = vmatpush2.bf16.msra.mxu0 0
    %143 = vmatprep.mubr.bf16.mxu0 0
    %144 = vmatmul.mubr.bf16.gmra.mxu0 %v68
    %v145 = vpop.f32.mrf.mxu0
    %v146 = vadd.f32 0.0, %v145
    %v147 = vpop.f32.mrf.mxu0
    %v148 = vpop.f32.mrf.mxu0
    %v149 = vpop.f32.mrf.mxu0
    %150 = vdwg.mxu0
    %v151 = vmul.f32 %v105, 10.0
    %v152 = vmul.f32 %v107, 10.0
    %v153 = vmax.f32 %v151, %v152
    %v154 = vsub.f32 %v151, %v153
    %v155 = vmul.f32 %v154, 1.442695
    %v156 = vpow.pop %v155
    %v157 = vsub.f32 %v152, %v153
    %v158 = vmul.f32 %v157, 1.442695
    %v159 = vpow.pop %v158
    %v160 = vadd.f32 %v156, %v159
    %v161 = vmul.f32 %v156, %v105
    %v162 = vmul.f32 %v159, %v107
    %v163 = vadd.f32 %v161, %v162
    %v164 = vmul.f32 %v146, 10.0
    %v165 = vmax.f32 %v153, %v164
    %v166 = vsub.f32 %v153, %v165
    %v167 = vmul.f32 %v166, 1.442695
    %v168 = vpow.pop %v167
    %v169 = vsub.f32 %v164, %v165
    %v170 = vmul.f32 %v169, 1.442695
    %v171 = vpow.pop %v170
    %v172 = vmul.f32 %v168, %v160
    %v173 = vadd.f32 %v172, %v171
    %v174 = vmul.f32 %v168, %v163
    %v175 = vmul.f32 %v171, %v146
    %v176 = vadd.f32 %v174, %v175
    %v177 = vrcp.pop %v173
    %v178 = vmul.f32 %v176, %v177
    %v179 = vlaneseq
    %v180 = vand.u32 %v179, 127
    %v181 = vld [vmem:[%s1] sm:$0xff]
    %182 = vset.pattern.permute.xlu0 0
    %183 = vperm.xlu0 %182, %v181
    %v184 = vpop.permute.xlu0 %183
    %vm185 = vcmp.eq.s32.totalorder %v180, %v184
    %v186 = vsel %vm185, 1, 0
    %v187 = vcvt.s32.f32 %v186
    %vm188 = vcmp.lt.s32.totalorder %v180, 4
    %v189 = vsel %vm188, 0.0, -1e+09
    %v190 = vmul.f32 %v187, 0.01
    %v191 = vsub.f32 %v178, %v190
    %v192 = vmul.f32 %v191, 20.0
    %v193 = vadd.f32 %v192, %v189
    %194 = vmax.xlane.f32.xlu0 %v193
    %v195 = vpop.xlane.xlu0 %194
    %v196 = vsub.f32 %v193, %v195
    %v197 = vmul.f32 %v196, 1.442695
    %v198 = vpow.pop %v197
    %199 = vadd.xlane.f32.xlu0 %v198
    %v200 = vpop.xlane.xlu0 %199
    %v201 = vlog2.pop %v200
    %v202 = vmul.f32 %v201, 0.6931472
    %v203 = vadd.f32 %v202, %v195
    %v204 = vsub.f32 %v203, %v193
    %v205 = vmul.f32 %v187, %v204
    %206 = vadd.xlane.f32.xlu0 %v205
    %v207 = vpop.xlane.xlu0 %206
    %v208 = vld [vmem:[#allocation5] sm:$0x1]
    %v209 = vld [vmem:[%s2] sm:$0xff]
    %v210 = vmul.f32 %v209, %v207
    %vm211 = vcmask 7168
    %v212 = vsel %vm211, %v210, 0.0
    %213 = vadd.xlane.f32.xlu0 %v212
    %v214 = vpop.xlane.xlu0 %213
    %v215 = vrot.slane %v214, 4
    %v216 = vadd.f32 %v214, %v215
    %v217 = vrot.slane %v216, 2
    %v218 = vadd.f32 %v216, %v217
    %v219 = vrot.slane %v218, 1
    %v220 = vadd.f32 %v218, %v219
    %s221 = vtos %v220
    %v222 = vstv %s221
    %v223 = vadd.f32 %v208, %v222
    %vm224 = vcmask 0
    %225 = vst.msk [vmem:[#allocation5] sm:$0x1] %vm224, %v223
    // Predicated region
    $region26: #{tpu_custom_call.1} parent=1 // pred_check
      %p226 = pneg %p33
    $region27: #{tpu_custom_call.1} parent=1 // pred_check_branch
      %228 = sbr.rel (%p226) target = $region29
    $region28: #{tpu_custom_call.1} parent=1 // pred_region
      %v229 = vld [vmem:[#allocation5] sm:$0x1]
      %v230 = vmul.f32 %v229, 0.125
      %v231 = vsel %vm188, 1, 0
      %v232 = vcvt.s32.f32 %v231
      %v233 = vmul.f32 %v49, %v50
      %v234 = vmul.f32 %v52, %v53
      %v235 = vmul.f32 %v55, %v56
      %v236 = vmul.f32 %v58, %v59
      %v237 = vadd.f32 %v233, %v234
      %v238 = vadd.f32 %v237, %v235
      %v239 = vadd.f32 %v238, %v236
      %v240 = vrot.slane %v239, 4
      %v241 = vadd.f32 %v239, %v240
      %v242 = vrot.slane %v241, 2
      %v243 = vadd.f32 %v241, %v242
      %v244 = vrot.slane %v243, 1
      %v245 = vadd.f32 %v243, %v244
      %v246 = vmul.f32 %v245, 2.0
      %v247 = vsub.f32 2.00001, %v246
      %v248 = vmax.f32 %v247, 0.0
      %v249 = vrsqrt.pop %v248
      %v250 = vmul.f32 %v248, %v249
      %vm251 = vcmp.eq.f32.partialorder %v248, inf
      %v252 = vsel %vm251, %v248, %v250
      %vm253 = vcmp.eq.f32.partialorder %v248, 0.0
      %v254 = vand.u32 %v248, 2147483648
      %v255 = vsel %vm253, %v254, %v252
      %v256 = vmul.f32 %v232, %v255
      %v257 = vadd.f32 %v256, 0.0
      %v258 = vmul.f32 %v49, %v51
      %v259 = vmul.f32 %v52, %v54
      %v260 = vmul.f32 %v55, %v57
      %v261 = vmul.f32 %v58, %v60
      %v262 = vadd.f32 %v258, %v259
      %v263 = vadd.f32 %v262, %v260
      %v264 = vadd.f32 %v263, %v261
      %v265 = vrot.slane %v264, 4
      %v266 = vadd.f32 %v264, %v265
      %v267 = vrot.slane %v266, 2
      %v268 = vadd.f32 %v266, %v267
      %v269 = vrot.slane %v268, 1
      %v270 = vadd.f32 %v268, %v269
      %v271 = vmul.f32 %v270, 2.0
      %v272 = vsub.f32 2.00001, %v271
      %v273 = vmax.f32 %v272, 0.0
      %v274 = vrsqrt.pop %v273
      %v275 = vmul.f32 %v273, %v274
      %vm276 = vcmp.eq.f32.partialorder %v273, inf
      %v277 = vsel %vm276, %v273, %v275
      %vm278 = vcmp.eq.f32.partialorder %v273, 0.0
      %v279 = vand.u32 %v273, 2147483648
      %v280 = vsel %vm278, %v279, %v277
      %v281 = vmul.f32 %v232, %v280
      %v282 = vadd.f32 %v257, %v281
      %v283 = vmul.f32 %v50, %v51
      %v284 = vmul.f32 %v53, %v54
      %v285 = vmul.f32 %v56, %v57
      %v286 = vmul.f32 %v59, %v60
      %v287 = vadd.f32 %v283, %v284
      %v288 = vadd.f32 %v287, %v285
      %v289 = vadd.f32 %v288, %v286
      %v290 = vrot.slane %v289, 4
      %v291 = vadd.f32 %v289, %v290
      %v292 = vrot.slane %v291, 2
      %v293 = vadd.f32 %v291, %v292
      %v294 = vrot.slane %v293, 1
      %v295 = vadd.f32 %v293, %v294
      %v296 = vmul.f32 %v295, 2.0
      %v297 = vsub.f32 2.00001, %v296
      %v298 = vmax.f32 %v297, 0.0
      %v299 = vrsqrt.pop %v298
      %v300 = vmul.f32 %v298, %v299
      %vm301 = vcmp.eq.f32.partialorder %v298, inf
      %v302 = vsel %vm301, %v298, %v300
      %vm303 = vcmp.eq.f32.partialorder %v298, 0.0
      %v304 = vand.u32 %v298, 2147483648
      %v305 = vsel %vm303, %v304, %v302
      %v306 = vmul.f32 %v232, %v305
      %v307 = vadd.f32 %v282, %v306
      %vm308 = vcmask 1040384
      %v309 = vsel %vm308, %v307, 0.0
      %310 = vadd.xlane.f32.xlu0 %v309
      %v311 = vpop.xlane.xlu0 %310
      %v312 = vrot.slane %v311, 4
      %v313 = vadd.f32 %v311, %v312
      %v314 = vrot.slane %v313, 2
      %v315 = vadd.f32 %v313, %v314
      %v316 = vrot.slane %v315, 1
      %v317 = vadd.f32 %v315, %v316
      %s318 = vtos %v317
      %v319 = vrcp.pop 24.0
      %s320 = vtos %v319
      %s321 = smul.f32 %s318, %s320
      %s322 = smul.f32 %s321, 0.2
      %v323 = vstv %s322
      %v324 = vadd.f32 %v230, %v323
      %325 = vst.msk [vmem:[#allocation5] sm:$0x1] %vm224, %v324
    $region29: #{tpu_custom_call.1} parent=1 // pred_fallthru
      _
    // Predicated region
    $region30: #{tpu_custom_call.1} parent=1 // pred_check
      _
    $region31: #{tpu_custom_call.1} parent=1 // pred_check_branch
      %327 = sbr.rel (0) target = $region33
    $region32: #{tpu_custom_call.1} parent=1 // pred_region
      %s329 = ssub.s32 16, 16
      %330 = vsyncadd [#allocation4], %s329
      %s332 = sshll.u32 [#allocation5], 4
      %s333 = int_to_ptr.vmem [resolvable:$true] %s332
      %335 = dma.vmem_to_hbm [thread:$0]  %s333, 16, %s4, [#allocation4]
    $region33: #{tpu_custom_call.1} parent=1 // pred_fallthru
      _
    // Predicated region
    $region34: #{tpu_custom_call.1} parent=1 // pred_check
      _
    $region35: #{tpu_custom_call.1} parent=1 // pred_check_branch
      %337 = sbr.rel (0) target = $region37
    $region36: #{tpu_custom_call.1} parent=1 // pred_region
      %338 = dma.done [#allocation4], 16
    $region37: #{tpu_custom_call.1} parent=1 // pred_fallthru
      _
    %339 = vsyncpa [#allocation3], 1
    %340 = vsyncpa [#allocation4], 1

</llo_original>
